<compile_context>
chip_gen: v6e
topology: v6e:2x2x1
jax: 0.10.0
libtpu: 0.0.40
codegen_flags: <defaults>
</compile_context>

<pallas_src>
import functools

import jax
import jax.numpy as jnp
from jax.experimental import pallas as pl
from jax.experimental.pallas import tpu as pltpu


def _lsce_kernel(x_ref, tgt_ref, out_ref, *, eps):
    """Fused label-smoothed cross-entropy, per row.

    x_ref:   (TN, C)  logits tile (native dtype, streamed as-is)
    tgt_ref: (TN, 1)  int32 class indices
    out_ref: (TN, 1)  f32 blended per-row loss
    """
    x = x_ref[...]                                            # (TN, C) native
    c = x.shape[-1]

    # Row statistics with f32 accumulation, no full f32 copy of the tile.
    m = jnp.max(x, axis=-1, keepdims=True).astype(jnp.float32)        # (TN,1)
    sum_x = jnp.sum(x, axis=-1, keepdims=True, dtype=jnp.float32)     # (TN,1)

    # Stabilized exp is the only (TN, C) f32 temporary.
    p = jnp.exp(x.astype(jnp.float32) - m)
    sum_exp = jnp.sum(p, axis=-1, keepdims=True)
    logz = m + jnp.log(sum_exp)                               # logsumexp

    # x[n, target[n]] via a broadcast compare against a (1, C) iota
    # (no (TN, C) int32 materialization; the compare broadcasts over rows).
    tgt = tgt_ref[...]                                        # (TN, 1) int32
    cls = jax.lax.broadcasted_iota(jnp.int32, (1, c), 1)      # (1, C)
    x_tgt = jnp.sum(jnp.where(cls == tgt, x, 0),
                    axis=-1, keepdims=True, dtype=jnp.float32)

    nll = logz - x_tgt                                        # -logp[target]
    smooth = logz - sum_x * (1.0 / c)                         # (-sum_c logp)/C
    out_ref[...] = (1.0 - eps) * nll + eps * smooth


def _choose_row_tile(n, c, in_itemsize):
    """Row tile sized against the whole VMEM working set:
         2 * rows * C * itemsize     (double-buffered input block)
       + 2 * rows * C * 4            (f32 intermediates: exp + one spare)
    kept under ~20 MiB so it fits the 32 MiB scoped limit on every TPU
    generation (v7x physical VMEM is 64 MiB).  Rows aligned to the packed
    sublane size of the input dtype (8 f32 / 16 bf16 / 32 int8|fp8)."""
    budget = 20 * 1024 * 1024
    per_row = c * (2 * in_itemsize + 2 * 4)
    align = max(8, 32 // max(1, in_itemsize))
    rows = budget // max(1, per_row)
    rows = max(align, (rows // align) * align)
    rows = min(rows, 4096)                    # relaxed cap (was 1024)
    n_aligned = ((n + align - 1) // align) * align
    return min(rows, n_aligned)


def label_smoothing_cross_entropy(output, target, eps=0.1, reduction="mean"):
    """Matches LabelSmoothingCrossEntropy(eps, reduction)(output, target)."""
    n, c = output.shape
    row_tile = _choose_row_tile(n, c, jnp.dtype(output.dtype).itemsize)

    tgt = target.astype(jnp.int32).reshape(n, 1)
    grid = (pl.cdiv(n, row_tile),)

    per_row = pl.pallas_call(
        functools.partial(_lsce_kernel, eps=float(eps)),
        out_shape=jax.ShapeDtypeStruct((n, 1), jnp.float32),
        grid_spec=pltpu.PrefetchScalarGridSpec(
            num_scalar_prefetch=0,
            grid=grid,
            in_specs=[
                pl.BlockSpec((row_tile, c), lambda i: (i, 0)),
                pl.BlockSpec((row_tile, 1), lambda i: (i, 0)),
            ],
            out_specs=pl.BlockSpec((row_tile, 1), lambda i: (i, 0)),
        ),
        compiler_params=pltpu.CompilerParams(
            dimension_semantics=("parallel",),
            # 32 MiB is >= the ~21 MiB working set and safe on v5e/v6e/v7x.
            vmem_limit_bytes=32 * 1024 * 1024,
        ),
    )(output, tgt)

    per_row = per_row[:, 0]
    if reduction == "mean":
        return jnp.mean(per_row)
    if reduction == "sum":
        return jnp.sum(per_row)
    return per_row  # 'none'


def _reference(output, target, eps=0.1, reduction="mean"):
    c = output.shape[-1]
    logp = jax.nn.log_softmax(output.astype(jnp.float32), axis=-1)
    loss = -jnp.sum(logp, axis=-1)
    nll = -jnp.take_along_axis(logp, target[:, None].astype(jnp.int32), axis=-1)[:, 0]
    if reduction == "mean":
        loss, nll = jnp.mean(loss), jnp.mean(nll)
    elif reduction == "sum":
        loss, nll = jnp.sum(loss), jnp.sum(nll)
    return (1.0 - eps) * nll + eps * (loss / c)


if __name__ == "__main__":
    key = jax.random.PRNGKey(0)
    k1, k2, k3, k4, k5, k6 = jax.random.split(key, 6)

    # Case 1: small batch / classes, mean + none reductions (exact tile).
    N, C = 8, 32
    logits = jax.random.normal(k1, (N, C), dtype=jnp.float32)
    target = jax.random.randint(k2, (N,), 0, C, dtype=jnp.int32)

    out_mean = jax.block_until_ready(
        label_smoothing_cross_entropy(logits, target, eps=0.1, reduction="mean"))
    ref_mean = _reference(logits, target, eps=0.1, reduction="mean")
    assert jnp.allclose(out_mean, ref_mean, atol=1e-5, rtol=1e-5), (out_mean, ref_mean)

    out_none = jax.block_until_ready(
        label_smoothing_cross_entropy(logits, target, eps=0.1, reduction="none"))
    ref_none = _reference(logits, target, eps=0.1, reduction="none")
    assert jnp.allclose(out_none, ref_none, atol=1e-5, rtol=1e-5)

    # Case 2: batch not a multiple of the tile (exercises the ragged last
    # block with NO host-side padding), sum reduction.
    N2, C2 = 50, 256
    logits2 = jax.random.normal(k3, (N2, C2), dtype=jnp.float32)
    target2 = jax.random.randint(k4, (N2,), 0, C2, dtype=jnp.int32)

    out_sum = jax.block_until_ready(
        label_smoothing_cross_entropy(logits2, target2, eps=0.1, reduction="sum"))
    ref_sum = _reference(logits2, target2, eps=0.1, reduction="sum")
    assert jnp.allclose(out_sum, ref_sum, atol=1e-4, rtol=1e-5), (out_sum, ref_sum)

    # Case 3: bf16 logits streamed natively (16-row alignment, ragged tile,
    # f32 accumulation inside the kernel).
    N3, C3 = 40, 128
    logits3 = jax.random.normal(k5, (N3, C3), dtype=jnp.float32).astype(jnp.bfloat16)
    target3 = jax.random.randint(k6, (N3,), 0, C3, dtype=jnp.int32)

    out_bf16 = jax.block_until_ready(
        label_smoothing_cross_entropy(logits3, target3, eps=0.1, reduction="mean"))
    ref_bf16 = _reference(logits3.astype(jnp.float32), target3, eps=0.1, reduction="mean")
    assert jnp.allclose(out_bf16, ref_bf16, atol=1e-4, rtol=1e-4), (out_bf16, ref_bf16)

    print("KERNEL_OK")
</pallas_src>

<mosaic_0001>
module attributes {stable_mosaic.version = 11 : i64} {
  func.func @_lsce_kernel(%arg0: i32, %arg1: memref<8x32xf32, #tpu.memory_space<vmem>>, %arg2: memref<8x1xi32, #tpu.memory_space<vmem>>, %arg3: memref<8x1xf32, #tpu.memory_space<vmem>>) attributes {dimension_semantics = [#tpu.dimension_semantics<parallel>], iteration_bounds = array<i64: 1>, scalar_prefetch = 0 : i64, scratch_operands = 0 : i64, tpu.core_type = #tpu.core_type<tc>, window_params = [{transform_indices = @transform_0, window_bounds = array<i64: 8, 32>}, {transform_indices = @transform_1, window_bounds = array<i64: 8, 1>}, {transform_indices = @transform_2, window_bounds = array<i64: 8, 1>}]} {
    %c0 = arith.constant 0 : index
    %c0_0 = arith.constant 0 : index
    %0 = vector.load %arg1[%c0, %c0_0] : memref<8x32xf32, #tpu.memory_space<vmem>>, vector<8x32xf32>
    %cst = arith.constant dense<0xFF800000> : vector<8xf32>
    %1 = vector.multi_reduction <maximumf>, %0, %cst [1] : vector<8x32xf32> to vector<8xf32>
    %2 = vector.shape_cast %1 : vector<8xf32> to vector<8x1xf32>
    %cst_1 = arith.constant dense<0.000000e+00> : vector<8xf32>
    %3 = vector.multi_reduction <add>, %0, %cst_1 [1] : vector<8x32xf32> to vector<8xf32>
    %4 = vector.shape_cast %3 : vector<8xf32> to vector<8x1xf32>
    %5 = vector.broadcast %2 : vector<8x1xf32> to vector<8x32xf32>
    %6 = arith.subf %0, %5 : vector<8x32xf32>
    %7 = math.exp %6 : vector<8x32xf32>
    %cst_2 = arith.constant dense<0.000000e+00> : vector<8xf32>
    %8 = vector.multi_reduction <add>, %7, %cst_2 [1] : vector<8x32xf32> to vector<8xf32>
    %9 = vector.shape_cast %8 : vector<8xf32> to vector<8x1xf32>
    %10 = math.log %9 : vector<8x1xf32>
    %11 = arith.addf %2, %10 : vector<8x1xf32>
    %c0_3 = arith.constant 0 : index
    %c0_4 = arith.constant 0 : index
    %12 = vector.load %arg2[%c0_3, %c0_4] : memref<8x1xi32, #tpu.memory_space<vmem>>, vector<8x1xi32>
    %13 = tpu.iota {dimensions = array<i32: 1>} : vector<1x32xi32>
    %14 = vector.broadcast %13 : vector<1x32xi32> to vector<8x32xi32>
    %15 = vector.broadcast %12 : vector<8x1xi32> to vector<8x32xi32>
    %16 = arith.cmpi eq, %14, %15 : vector<8x32xi32>
    %c0_i32 = arith.constant 0 : i32
    %17 = arith.sitofp %c0_i32 : i32 to f32
    %18 = vector.broadcast %17 : f32 to vector<8x32xf32>
    %19 = arith.select %16, %0, %18 : vector<8x32xi1>, vector<8x32xf32>
    %cst_5 = arith.constant dense<0.000000e+00> : vector<8xf32>
    %20 = vector.multi_reduction <add>, %19, %cst_5 [1] : vector<8x32xf32> to vector<8xf32>
    %21 = vector.shape_cast %20 : vector<8xf32> to vector<8x1xf32>
    %22 = arith.subf %11, %21 : vector<8x1xf32>
    %cst_6 = arith.constant 3.125000e-02 : f32
    %23 = vector.broadcast %cst_6 : f32 to vector<8x1xf32>
    %24 = arith.mulf %4, %23 : vector<8x1xf32>
    %25 = arith.subf %11, %24 : vector<8x1xf32>
    %cst_7 = arith.constant 0.899999976 : f32
    %26 = vector.broadcast %cst_7 : f32 to vector<8x1xf32>
    %27 = arith.mulf %26, %22 : vector<8x1xf32>
    %cst_8 = arith.constant 1.000000e-01 : f32
    %28 = vector.broadcast %cst_8 : f32 to vector<8x1xf32>
    %29 = arith.mulf %28, %25 : vector<8x1xf32>
    %30 = arith.addf %27, %29 : vector<8x1xf32>
    %c0_9 = arith.constant 0 : index
    %c0_10 = arith.constant 0 : index
    %31 = vector.load %arg3[%c0_9, %c0_10] : memref<8x1xf32, #tpu.memory_space<vmem>>, vector<8x1xf32>
    tpu.vector_store %arg3[%c0_9, %c0_10], %30 {strides = array<i32>} : memref<8x1xf32, #tpu.memory_space<vmem>>, vector<8x1xf32>,
    return
  }
  func.func @transform_0(%arg0: i32) -> (i32, i32) {
    %c0_i32 = arith.constant 0 : i32
    %c0_i32_0 = arith.constant 0 : i32
    return %arg0, %c0_i32 : i32, i32
  }
  func.func @transform_1(%arg0: i32) -> (i32, i32) {
    %c0_i32 = arith.constant 0 : i32
    %c0_i32_0 = arith.constant 0 : i32
    return %arg0, %c0_i32 : i32, i32
  }
  func.func @transform_2(%arg0: i32) -> (i32, i32) {
    %c0_i32 = arith.constant 0 : i32
    %c0_i32_0 = arith.constant 0 : i32
    return %arg0, %c0_i32 : i32, i32
  }
}

</mosaic_0001>

<llo_original>
// kernel: tpu_custom_call.1
$region0: #{tpu_custom_call.1}
  #allocation0 [shape = 'u32[]', space=smem, size = 0x4, offset = 0x4, fixed_abs, tag = 'smem constant byte address 0x4 - core index']
  #allocation1 [shape = 'u32[144,128]{1,0:T(1,128)}', space=vmem, size = 0x12000, scoped, tag = 'internal scratch']
  %s0 = inlined_call_operand.vmem [shape: f32[8,32], index: 0, kind: input, shape index: {}]
  %s1 = inlined_call_operand.vmem [shape: s32[8,1], index: 1, kind: input, shape index: {}]
  %s2 = inlined_call_operand.vmem [shape: f32[8,1], index: 2, kind: output, shape index: {}]
  %s3 = sld [smem:[#allocation0]]
  $region18: #{tpu_custom_call.1} parent=0
    _
  %s5 = ssub.s32 1, %s3
  %s6 = scalar_select 0, %s5, %s3
  // Predicated region
  $region2: #{tpu_custom_call.1} parent=0 // pred_check
    _
  $region3: #{tpu_custom_call.1} parent=0 // pred_check_branch
    %8 = sbr.rel (0) target = $region5
  $region4: #{tpu_custom_call.1} parent=0 // pred_region
    _
  $region5: #{tpu_custom_call.1} parent=0 // pred_fallthru
    _
  // Predicated region
  $region6: #{tpu_custom_call.1} parent=0 // pred_check
    _
  $region7: #{tpu_custom_call.1} parent=0 // pred_check_branch
    %10 = sbr.rel (0) target = $region9
  $region8: #{tpu_custom_call.1} parent=0 // pred_region
    _
  $region9: #{tpu_custom_call.1} parent=0 // pred_fallthru
    _
  %v11 = vld [vmem:[%s0] sm:$0xff]
  %vm12 = vcmask 261120
  %v13 = vsel %vm12, %v11, -inf
  %14 = vmax.xlane.f32.xlu0 %v13
  %v15 = vpop.xlane.xlu0 %14
  %v16 = vsel %vm12, %v11, 0.0
  %17 = vadd.xlane.f32.xlu0 %v16
  %v18 = vpop.xlane.xlu0 %17
  %v19 = vsub.f32 %v11, %v15
  %v20 = vmul.f32 %v19, 1.442695
  %v21 = vpow.pop %v20
  %v22 = vsel %vm12, %v21, 0.0
  %23 = vadd.xlane.f32.xlu0 %v22
  %v24 = vpop.xlane.xlu0 %23
  %v25 = vlog2.pop %v24
  %v26 = vmul.f32 %v25, 0.6931472
  %v27 = vadd.f32 %v15, %v26
  %v28 = vld [vmem:[%s1] sm:$0xff]
  %v29 = vlaneseq
  %v30 = vand.u32 %v29, 127
  %31 = vset.pattern.permute.xlu0 0
  %32 = vperm.xlu0 %31, %v28
  %v33 = vpop.permute.xlu0 %32
  %vm34 = vcmp.eq.s32.totalorder %v30, %v33
  %v35 = vsel %vm34, %v11, 0.0
  %v36 = vsel %vm12, %v35, 0.0
  %37 = vadd.xlane.f32.xlu0 %v36
  %v38 = vpop.xlane.xlu0 %37
  %v39 = vsub.f32 %v27, %v38
  %v40 = vmul.f32 %v18, 0.03125
  %v41 = vsub.f32 %v27, %v40
  %v42 = vmul.f32 %v39, 0.9
  %v43 = vmul.f32 %v41, 0.1
  %v44 = vadd.f32 %v42, %v43
  %vm45 = vcmask 7168
  %46 = vst.msk [vmem:[%s2] sm:$0xff] %vm45, %v44
  // Predicated region
  $region10: #{tpu_custom_call.1} parent=0 // pred_check
    _
  $region11: #{tpu_custom_call.1} parent=0 // pred_check_branch
    %48 = sbr.rel (0) target = $region13
  $region12: #{tpu_custom_call.1} parent=0 // pred_region
    _
  $region13: #{tpu_custom_call.1} parent=0 // pred_fallthru
    _
  // Predicated region
  $region14: #{tpu_custom_call.1} parent=0 // pred_check
    _
  $region15: #{tpu_custom_call.1} parent=0 // pred_check_branch
    %50 = sbr.rel (0) target = $region17
  $region16: #{tpu_custom_call.1} parent=0 // pred_region
    _
  $region17: #{tpu_custom_call.1} parent=0 // pred_fallthru
    _

</llo_original>
